<compile_context>
chip_gen: v7x
topology: tpu7x:2x2x1
jax: 0.10.0
libtpu: 0.0.40
codegen_flags: <defaults>
</compile_context>

<pallas_src>
import functools

import jax
import jax.numpy as jnp
from jax.experimental import pallas as pl
from jax.experimental.pallas import tpu as pltpu


def _round_up(x, m):
    return ((x + m - 1) // m) * m


def _choose_tile_hw(hw, n_batch, requested):
    """Spatial (lane) tile: multiple of 128, clamped to the array, and small
    enough that the total grid has >= 2 steps (v7x megacore) when possible."""
    if hw <= 128:
        return hw
    t = min(requested, _round_up(hw, 128))
    t = max(128, (t // 128) * 128)
    if n_batch == 1:
        half = max(128, _round_up((hw + 1) // 2, 128))
        t = min(t, half)
    return t


def _hidden_chunks(hidden, chunk=256):
    """Static chunk boundaries over the hidden dim (lane-aligned slices of the
    final-layer weight).  Falls back to a single chunk if not 128-aligned."""
    if hidden <= chunk or hidden % 128 != 0:
        return ((0, hidden),)
    bounds = []
    c0 = 0
    while c0 < hidden:
        c1 = min(c0 + chunk, hidden)
        bounds.append((c0, c1))
        c0 = c1
    return tuple(bounds)


# ----------------------------------------------------------------------------
# Kernel
# ----------------------------------------------------------------------------
def _make_sep_head_kernel(num_layers, chunk_bounds, compute_dtype):
    """Fused per-pixel MLP, NCHW orientation: channels on sublanes, pixels on lanes.

    refs = (x_ref, w0, b0, w1, b1, ..., o_ref); weights are (C_out, C_in),
    biases are (C_out, 1) fp32.  Matmuls run in bf16 on the MXU with fp32
    accumulation.  The last two layers are fused in chunks over the hidden dim
    so the fp32 intermediate stays small.
    """

    def kernel(*refs):
        x_ref = refs[0]
        o_ref = refs[-1]
        wb = [(refs[1 + 2 * l], refs[2 + 2 * l]) for l in range(num_layers)]

        h = x_ref[0].astype(compute_dtype)  # (C_in, tile_hw)

        # Full-width hidden layers 0 .. L-3 (only present when num_conv > 2).
        for l in range(num_layers - 2):
            w_ref, b_ref = wb[l]
            t = jnp.dot(w_ref[...], h, preferred_element_type=jnp.float32)
            h = jnp.maximum(t + b_ref[...], 0.0).astype(compute_dtype)

        if num_layers == 1:
            w_ref, b_ref = wb[0]
            out = jnp.dot(w_ref[...], h, preferred_element_type=jnp.float32)
            out = out + b_ref[...]
        else:
            wa_ref, ba_ref = wb[num_layers - 2]  # last hidden layer
            wb_ref, bb_ref = wb[num_layers - 1]  # final layer (block-diagonal)
            out = None
            for c0, c1 in chunk_bounds:
                hc = jnp.dot(wa_ref[c0:c1, :], h,
                             preferred_element_type=jnp.float32)
                hc = jnp.maximum(hc + ba_ref[c0:c1, :], 0.0).astype(compute_dtype)
                part = jnp.dot(wb_ref[:, c0:c1], hc,
                               preferred_element_type=jnp.float32)
                out = part if out is None else out + part
            out = out + bb_ref[...]

        o_ref[0] = out.astype(o_ref.dtype)

    return kernel


# ----------------------------------------------------------------------------
# Parameter construction / fusion
# ----------------------------------------------------------------------------
def init_sep_head_params(key, in_channels, heads, head_conv=64, init_bias=-2.19):
    """Deterministic synthetic parameters matching SepHead.__init__ shapes.

    PyTorch Conv2d weight (out, in, 1, 1) is stored as an (out, in) matrix;
    bias as (out,).  'hm' head final bias is filled with init_bias.
    """
    params = {}
    for head, (classes, num_conv) in heads.items():
        layers = []
        c_in = in_channels
        for _ in range(num_conv - 1):
            key, kw, kb = jax.random.split(key, 3)
            w = jax.random.normal(kw, (head_conv, c_in), jnp.float32) * (
                2.0 / c_in) ** 0.5  # kaiming-like scale
            b = jax.random.normal(kb, (head_conv,), jnp.float32) * 0.01
            layers.append((w, b))
            c_in = head_conv
        key, kw, kb = jax.random.split(key, 3)
        w = jax.random.normal(kw, (classes, c_in), jnp.float32) * (2.0 / c_in) ** 0.5
        if "hm" in head:
            b = jnp.full((classes,), init_bias, jnp.float32)
        else:
            b = jax.random.normal(kb, (classes,), jnp.float32) * 0.01
        layers.append((w, b))
        params[head] = layers
    return params


def fuse_sep_head_params(params, compute_dtype=jnp.bfloat16):
    """Fuse per-head 1x1-conv stacks into one wide per-pixel MLP (NCHW layout).

    Layer 0 (shared input): weights concatenated along the output-channel rows.
    Layers 1..L-1: block-diagonal.  No channel padding anywhere.
    """
    head_names = list(params.keys())
    n_layers = {len(layers) for layers in params.values()}
    # TODO(synk): heads with differing num_conv would need separate pallas_calls.
    assert len(n_layers) == 1, "fused SepHead path requires equal num_conv per head"
    num_layers = n_layers.pop()

    weights, biases = [], []
    for l in range(num_layers):
        ws = [params[h][l][0] for h in head_names]  # (out_h, in_h)
        bs = [params[h][l][1] for h in head_names]  # (out_h,)
        total_out = sum(w.shape[0] for w in ws)

        if l == 0:
            c_in = ws[0].shape[1]
            W = jnp.zeros((total_out, c_in), jnp.float32)
            B = jnp.zeros((total_out, 1), jnp.float32)
            off = 0
            for w, b in zip(ws, bs):
                W = W.at[off:off + w.shape[0], :].set(w)
                B = B.at[off:off + w.shape[0], 0].set(b)
                off += w.shape[0]
        else:
            total_in = sum(w.shape[1] for w in ws)
            W = jnp.zeros((total_out, total_in), jnp.float32)
            B = jnp.zeros((total_out, 1), jnp.float32)
            roff = coff = 0
            for w, b in zip(ws, bs):
                W = W.at[roff:roff + w.shape[0], coff:coff + w.shape[1]].set(w)
                B = B.at[roff:roff + w.shape[0], 0].set(b)
                roff += w.shape[0]
                coff += w.shape[1]

        weights.append(W.astype(compute_dtype))
        biases.append(B)  # biases stay fp32

    head_slices = []
    off = 0
    for h in head_names:
        c = params[h][-1][0].shape[0]
        head_slices.append((h, off, c))
        off += c

    return {
        "weights": tuple(weights),
        "biases": tuple(biases),
        "head_slices": tuple(head_slices),
        "num_layers": num_layers,
        "out_channels": off,
    }


# ----------------------------------------------------------------------------
# Forward
# ----------------------------------------------------------------------------
def sep_head_forward(x_nchw, weights, biases, *, head_slices, num_layers,
                     out_channels, tile_hw=2048, compute_dtype=jnp.bfloat16):
    """Fused SepHead forward.  x_nchw: (N, C_in, H, W) -> dict head -> (N, classes, H, W)."""
    N, C, H, W = x_nchw.shape
    HW = H * W

    # NCHW-native: (N, C, H*W) is a free reshape (no transpose, no pad, no cast).
    x3d = x_nchw.reshape(N, C, HW)

    tm = _choose_tile_hw(HW, N, tile_hw)
    grid_hw = pl.cdiv(HW, tm)  # ragged last block handled by Pallas masking

    if num_layers >= 2:
        hidden = weights[num_layers - 2].shape[0]
        chunk_bounds = _hidden_chunks(hidden)
    else:
        chunk_bounds = ()

    kernel = _make_sep_head_kernel(num_layers, chunk_bounds, compute_dtype)

    in_specs = [pl.BlockSpec((1, C, tm), lambda n, s: (n, 0, s))]
    args = [x3d]
    for w, b in zip(weights, biases):
        # Grid-invariant weight/bias blocks: fetched once, revisited every step.
        in_specs.append(pl.BlockSpec(w.shape, lambda n, s: (0, 0)))
        in_specs.append(pl.BlockSpec(b.shape, lambda n, s: (0, 0)))
        args.append(w)
        args.append(b)

    y = pl.pallas_call(
        kernel,
        out_shape=jax.ShapeDtypeStruct((N, out_channels, HW), jnp.float32),
        grid_spec=pltpu.PrefetchScalarGridSpec(
            num_scalar_prefetch=0,
            grid=(N, grid_hw),
            in_specs=in_specs,
            # Lane-dense output: last dim is the spatial tile (multiple of 128);
            # channel dim is the real 13 channels (no padding to 128).
            out_specs=pl.BlockSpec((1, out_channels, tm), lambda n, s: (n, 0, s)),
        ),
        compiler_params=pltpu.CompilerParams(
            dimension_semantics=("parallel", "parallel"),
            vmem_limit_bytes=64 * 1024 * 1024,
        ),
    )(*args)

    ret = {}
    for head, off, c in head_slices:
        # Contiguous row slice along the fused channel axis -- essentially free.
        ret[head] = y[:, off:off + c, :].reshape(N, c, H, W)
    return ret


# ----------------------------------------------------------------------------
# Pure-JAX reference (same bf16-operand / fp32-accumulate numerics)
# ----------------------------------------------------------------------------
def sep_head_reference(x_nchw, params, compute_dtype=jnp.bfloat16):
    N, C, H, W = x_nchw.shape
    x = (x_nchw.reshape(N, C, H * W)
         .astype(compute_dtype)
         .astype(jnp.float32))
    ret = {}
    for head, layers in params.items():
        h = x
        for i, (w, b) in enumerate(layers):
            w32 = w.astype(compute_dtype).astype(jnp.float32)
            h = jnp.einsum("oi,nip->nop", w32, h) + b.reshape(1, -1, 1)
            if i < len(layers) - 1:
                h = jnp.maximum(h, 0.0).astype(compute_dtype).astype(jnp.float32)
        ret[head] = h.reshape(N, -1, H, W)
    return ret


if __name__ == "__main__":
    # Small, CenterPoint-like configuration (final_kernel=1, bn=None, num_conv=2).
    in_channels = 32
    head_conv = 64
    heads = {
        "reg": (2, 2),
        "height": (1, 2),
        "dim": (3, 2),
        "rot": (2, 2),
        "vel": (2, 2),
        "hm": (3, 2),
    }

    key = jax.random.PRNGKey(0)
    key, kx = jax.random.split(key)
    N, H, W = 2, 16, 16
    x = jax.random.normal(kx, (N, in_channels, H, W), jnp.float32)

    params = init_sep_head_params(key, in_channels, heads, head_conv=head_conv)
    fused = fuse_sep_head_params(params)

    fwd = jax.jit(
        functools.partial(
            sep_head_forward,
            head_slices=fused["head_slices"],
            num_layers=fused["num_layers"],
            out_channels=fused["out_channels"],
        )
    )
    out = fwd(x, fused["weights"], fused["biases"])
    for head in heads:
        jax.block_until_ready(out[head])
        expected_c = heads[head][0]
        assert out[head].shape == (N, expected_c, H, W), (head, out[head].shape)

    # Numerical check against a pure-JAX reference using identical bf16 casts.
    ref = sep_head_reference(x, params)
    for head in heads:
        ok = jnp.allclose(out[head], ref[head], rtol=1e-2, atol=1e-2)
        assert bool(ok), f"mismatch on head {head}"

    print("KERNEL_OK")
</pallas_src>

<mosaic_0001>
module attributes {stable_mosaic.version = 11 : i64} {
  func.func @kernel(%arg0: i32, %arg1: i32, %arg2: memref<1x32x256xf32, #tpu.memory_space<vmem>>, %arg3: memref<384x32xbf16, #tpu.memory_space<vmem>>, %arg4: memref<384x1xf32, #tpu.memory_space<vmem>>, %arg5: memref<13x384xbf16, #tpu.memory_space<vmem>>, %arg6: memref<13x1xf32, #tpu.memory_space<vmem>>, %arg7: memref<1x13x256xf32, #tpu.memory_space<vmem>>) attributes {dimension_semantics = [#tpu.dimension_semantics<parallel>, #tpu.dimension_semantics<parallel>], iteration_bounds = array<i64: 2, 1>, scalar_prefetch = 0 : i64, scratch_operands = 0 : i64, tpu.core_type = #tpu.core_type<tc>, window_params = [{transform_indices = @transform_0, window_bounds = array<i64: 1, 32, 256>}, {pipeline_mode = #tpu.pipeline_mode<synchronous>, transform_indices = @transform_1, window_bounds = array<i64: 384, 32>}, {pipeline_mode = #tpu.pipeline_mode<synchronous>, transform_indices = @transform_2, window_bounds = array<i64: 384, 1>}, {pipeline_mode = #tpu.pipeline_mode<synchronous>, transform_indices = @transform_3, window_bounds = array<i64: 13, 384>}, {pipeline_mode = #tpu.pipeline_mode<synchronous>, transform_indices = @transform_4, window_bounds = array<i64: 13, 1>}, {transform_indices = @transform_5, window_bounds = array<i64: 1, 13, 256>}]} {
    %c0 = arith.constant 0 : index
    %c0_0 = arith.constant 0 : index
    %c0_1 = arith.constant 0 : index
    %0 = vector.load %arg2[%c0, %c0_0, %c0_1] : memref<1x32x256xf32, #tpu.memory_space<vmem>>, vector<1x32x256xf32>
    %1 = vector.shape_cast %0 : vector<1x32x256xf32> to vector<32x256xf32>
    %2 = arith.truncf %1 : vector<32x256xf32> to vector<32x256xbf16>
    %c0_2 = arith.constant 0 : index
    %c0_3 = arith.constant 0 : index
    %3 = vector.load %arg3[%c0_2, %c0_3] : memref<384x32xbf16, #tpu.memory_space<vmem>>, vector<256x32xbf16>
    %cst = arith.constant dense<0.000000e+00> : vector<256x256xf32>
    %4 = tpu.matmul %3, %2, %cst {dimension_numbers = #tpu.dot_dimension_numbers<[1], [0], [0], [1], [0, 0, 1, 1], [], []>} : vector<256x32xbf16>, vector<32x256xbf16>, vector<256x256xf32> -> vector<256x256xf32>
    %c0_4 = arith.constant 0 : index
    %c0_5 = arith.constant 0 : index
    %5 = vector.load %arg4[%c0_4, %c0_5] : memref<384x1xf32, #tpu.memory_space<vmem>>, vector<256x1xf32>
    %6 = vector.broadcast %5 : vector<256x1xf32> to vector<256x256xf32>
    %7 = arith.addf %4, %6 : vector<256x256xf32>
    %cst_6 = arith.constant 0.000000e+00 : f32
    %8 = vector.broadcast %cst_6 : f32 to vector<256x256xf32>
    %9 = arith.maximumf %7, %8 : vector<256x256xf32>
    %10 = arith.truncf %9 : vector<256x256xf32> to vector<256x256xbf16>
    %c0_7 = arith.constant 0 : index
    %c0_8 = arith.constant 0 : index
    %11 = vector.load %arg5[%c0_7, %c0_8] : memref<13x384xbf16, #tpu.memory_space<vmem>>, vector<13x256xbf16>
    %cst_9 = arith.constant dense<0.000000e+00> : vector<13x256xf32>
    %12 = tpu.matmul %11, %10, %cst_9 {dimension_numbers = #tpu.dot_dimension_numbers<[1], [0], [0], [1], [0, 0, 1, 1], [], []>} : vector<13x256xbf16>, vector<256x256xbf16>, vector<13x256xf32> -> vector<13x256xf32>
    %c256 = arith.constant 256 : index
    %c0_10 = arith.constant 0 : index
    %13 = vector.load %arg3[%c256, %c0_10] : memref<384x32xbf16, #tpu.memory_space<vmem>>, vector<128x32xbf16>
    %cst_11 = arith.constant dense<0.000000e+00> : vector<128x256xf32>
    %14 = tpu.matmul %13, %2, %cst_11 {dimension_numbers = #tpu.dot_dimension_numbers<[1], [0], [0], [1], [0, 0, 1, 1], [], []>} : vector<128x32xbf16>, vector<32x256xbf16>, vector<128x256xf32> -> vector<128x256xf32>
    %c256_12 = arith.constant 256 : index
    %c0_13 = arith.constant 0 : index
    %15 = vector.load %arg4[%c256_12, %c0_13] : memref<384x1xf32, #tpu.memory_space<vmem>>, vector<128x1xf32>
    %16 = vector.broadcast %15 : vector<128x1xf32> to vector<128x256xf32>
    %17 = arith.addf %14, %16 : vector<128x256xf32>
    %cst_14 = arith.constant 0.000000e+00 : f32
    %18 = vector.broadcast %cst_14 : f32 to vector<128x256xf32>
    %19 = arith.maximumf %17, %18 : vector<128x256xf32>
    %20 = arith.truncf %19 : vector<128x256xf32> to vector<128x256xbf16>
    %c0_15 = arith.constant 0 : index
    %c256_16 = arith.constant 256 : index
    %21 = vector.load %arg5[%c0_15, %c256_16] : memref<13x384xbf16, #tpu.memory_space<vmem>>, vector<13x128xbf16>
    %cst_17 = arith.constant dense<0.000000e+00> : vector<13x256xf32>
    %22 = tpu.matmul %21, %20, %cst_17 {dimension_numbers = #tpu.dot_dimension_numbers<[1], [0], [0], [1], [0, 0, 1, 1], [], []>} : vector<13x128xbf16>, vector<128x256xbf16>, vector<13x256xf32> -> vector<13x256xf32>
    %23 = arith.addf %12, %22 : vector<13x256xf32>
    %c0_18 = arith.constant 0 : index
    %c0_19 = arith.constant 0 : index
    %24 = vector.load %arg6[%c0_18, %c0_19] : memref<13x1xf32, #tpu.memory_space<vmem>>, vector<13x1xf32>
    %25 = vector.broadcast %24 : vector<13x1xf32> to vector<13x256xf32>
    %26 = arith.addf %23, %25 : vector<13x256xf32>
    %c0_20 = arith.constant 0 : index
    %c0_21 = arith.constant 0 : index
    %c0_22 = arith.constant 0 : index
    %27 = vector.load %arg7[%c0_20, %c0_21, %c0_22] : memref<1x13x256xf32, #tpu.memory_space<vmem>>, vector<1x13x256xf32>
    %28 = vector.shape_cast %27 : vector<1x13x256xf32> to vector<13x256xf32>
    %29 = vector.shape_cast %26 : vector<13x256xf32> to vector<1x13x256xf32>
    tpu.vector_store %arg7[%c0_20, %c0_21, %c0_22], %29 {strides = array<i32>} : memref<1x13x256xf32, #tpu.memory_space<vmem>>, vector<1x13x256xf32>,
    return
  }
  func.func @transform_0(%arg0: i32, %arg1: i32) -> (i32, i32, i32) {
    %c0_i32 = arith.constant 0 : i32
    %c0_i32_0 = arith.constant 0 : i32
    return %arg0, %c0_i32, %arg1 : i32, i32, i32
  }
  func.func @transform_1(%arg0: i32, %arg1: i32) -> (i32, i32) {
    %c0_i32 = arith.constant 0 : i32
    %c0_i32_0 = arith.constant 0 : i32
    %c0_i32_1 = arith.constant 0 : i32
    return %c0_i32, %c0_i32_0 : i32, i32
  }
  func.func @transform_2(%arg0: i32, %arg1: i32) -> (i32, i32) {
    %c0_i32 = arith.constant 0 : i32
    %c0_i32_0 = arith.constant 0 : i32
    %c0_i32_1 = arith.constant 0 : i32
    return %c0_i32, %c0_i32_0 : i32, i32
  }
  func.func @transform_3(%arg0: i32, %arg1: i32) -> (i32, i32) {
    %c0_i32 = arith.constant 0 : i32
    %c0_i32_0 = arith.constant 0 : i32
    %c0_i32_1 = arith.constant 0 : i32
    return %c0_i32, %c0_i32_0 : i32, i32
  }
  func.func @transform_4(%arg0: i32, %arg1: i32) -> (i32, i32) {
    %c0_i32 = arith.constant 0 : i32
    %c0_i32_0 = arith.constant 0 : i32
    %c0_i32_1 = arith.constant 0 : i32
    return %c0_i32, %c0_i32_0 : i32, i32
  }
  func.func @transform_5(%arg0: i32, %arg1: i32) -> (i32, i32, i32) {
    %c0_i32 = arith.constant 0 : i32
    %c0_i32_0 = arith.constant 0 : i32
    return %arg0, %c0_i32, %arg1 : i32, i32, i32
  }
}

</mosaic_0001>

<llo_original>
// kernel: sep_head_forward.1
$region0: #{sep_head_forward.1}
  #allocation0 [shape = 'u32[]', space=smem, size = 0x4, offset = 0x4, fixed_abs, tag = 'smem constant byte address 0x4 - core index']
  #allocation1 [shape = 'u32[144,128]{1,0:T(1,128)}', space=vmem, size = 0x12000, scoped, tag = 'internal scratch']
  %s0 = inlined_call_operand.hbm [shape: f32[2,32,256], index: 0, kind: input, shape index: {}]
  %s1 = inlined_call_operand.hbm [shape: bf16[384,32], index: 1, kind: input, shape index: {}]
  %s2 = inlined_call_operand.hbm [shape: f32[384,1], index: 2, kind: input, shape index: {}]
  %s3 = inlined_call_operand.hbm [shape: bf16[13,384], index: 3, kind: input, shape index: {}]
  %s4 = inlined_call_operand.hbm [shape: f32[13,1], index: 4, kind: input, shape index: {}]
  %s5 = inlined_call_operand.hbm [shape: f32[2,13,256], index: 5, kind: output, shape index: {}]
  %s6 = sld [smem:[#allocation0]]
  $region73: #{sep_head_forward.1} parent=0
    _
  %s8 = ssub.s32 1, %s6
  %s9 = scalar_select 0, %s8, %s6
  $region1: #{sep_head_forward.1} parent=0
    #allocation2 [shape = 'u8[65536]{0}', space=vmem, size = 0x10000, scoped, tag = 'input window, operand 0']
    #allocation3 [shape = 's32[2]{0}', space=sflag, size = 0x8, scoped, tag = 'scoped memory for sep_head_forward.1']
    #allocation4 [shape = 's32[2]{0}', space=sflag, size = 0x8, scoped, tag = 'scoped memory for sep_head_forward.1']
    #allocation5 [shape = 'u8[98304]{0}', space=vmem, size = 0x18000, scoped, tag = 'input window, operand 1, single buffered']
    #allocation6 [shape = 's32[1]{0}', space=sflag, size = 0x4, scoped, tag = 'scoped memory for sep_head_forward.1']
    #allocation7 [shape = 'u8[196608]{0}', space=vmem, size = 0x30000, scoped, tag = 'input window, operand 2, single buffered']
    #allocation8 [shape = 'u8[12288]{0}', space=vmem, size = 0x3000, scoped, tag = 'input window, operand 3, single buffered']
    #allocation9 [shape = 's32[1]{0}', space=sflag, size = 0x4, scoped, tag = 'scoped memory for sep_head_forward.1']
    #allocation10 [shape = 'u8[8192]{0}', space=vmem, size = 0x2000, scoped, tag = 'input window, operand 4, single buffered']
    #allocation11 [shape = 'u8[32768]{0}', space=vmem, size = 0x8000, scoped, tag = 'output window, operand 0']
    %10 = vsyncpa [#allocation3], 0
    %s11 = scalar_lea.sflag [#allocation3], 1
    %12 = vsyncpa %s11, 0
    %13 = vsyncpa [#allocation6], 0
    %14 = vsyncpa [#allocation9], 0
    %15 = vsyncpa [#allocation4], 0
    %s16 = scalar_lea.sflag [#allocation4], 1
    %17 = vsyncpa %s16, 0
    loop: start=0, step=1, limit=4
    $region2: #{sep_head_forward.1} parent=1 // loop_pre_header
      _
    $region3: #{sep_head_forward.1} parent=1 // loop_header
      %s19 = sphi 0, %s23
      %p20 = scmp.ge.s32.totalorder %s19, 4
      %s26 = sphi 0, %s38
      %s27 = sphi 0, %s34
      %s28 = sphi 0, %s26
      %s29 = sphi 0, %s27
      %s30 = sphi 0, %s28
      %s31 = sphi 0, %s29
      %s43 = sphi 0, %s45
      %s46 = sphi 0, %s43
      %s47 = sphi 0, %s46
      %s63 = sphi 0, %s47
      %s67 = sphi 0, %s67
      %s69 = sphi 0, %s67
      %s70 = sphi 0, %s69
      %s84 = sphi 0, %s70
      %s88 = sphi 0, %s88
      %s90 = sphi 0, %s88
      %s91 = sphi 0, %s90
      %s105 = sphi 0, %s91
      %s109 = sphi 0, %s109
      %s111 = sphi 0, %s109
      %s112 = sphi 0, %s111
      %s126 = sphi 0, %s112
      %s130 = sphi 0, %s130
      %s132 = sphi 0, %s130
      %s133 = sphi 0, %s132
      %s147 = sphi 0, %s133
      %s155 = sphi 0, %s157
      %s158 = sphi 0, %s155
      %s159 = sphi 0, %s158
      %s175 = sphi 0, %s159
    $region4: #{sep_head_forward.1} parent=1 // loop_header_branch
      %22 = sbr.rel (%p20) target = $region8
    $region5: #{sep_head_forward.1} parent=1 // loop_body
      %s24 = ssub.s32 %s19, 1
      %s25 = ssub.s32 %s19, 2
      %s32 = sadd.s32 1, %s27
      %p33 = scmp.ge.s32.totalorder %s32, 1
      %s34 = scalar_select %p33, 0, %s32
      %s35 = sadd.s32 1, %s26
      %s36 = scalar_select %p33, %s35, %s26
      %p37 = scmp.ge.s32.totalorder %s36, 2
      %s38 = scalar_select %p37, 0, %s36
      %s39 = ssub.s32 %s26, %s38
      %s40 = ssub.s32 %s27, %s34
      %s41 = sor.u32 %s39, %s40
      %p42 = scmp.eq.s32.totalorder %s41, 0
      %s44 = sadd.s32 %s43, 1
      %s45 = scalar_select %p42, %s43, %s44
      %p48 = pneg %p42
      %p49 = scmp.eq.s32.totalorder %s19, 1
      %p50 = por %p48, %p49
      %p51 = scmp.ne.s32.totalorder %s43, %s46
      %p52 = scmp.eq.s32.totalorder %s19, 0
      %p53 = por %p51, %p52
      %p54 = scmp.ne.s32.totalorder %s43, %s46
      %p55 = scmp.eq.s32.totalorder %s24, 1
      %p56 = por %p54, %p55
      %p57 = scmp.ne.s32.totalorder %s46, %s47
      %p58 = scmp.eq.s32.totalorder %s24, 0
      %p59 = por %p57, %p58
      %p60 = scmp.ne.s32.totalorder %s46, %s47
      %p61 = scmp.eq.s32.totalorder %s25, 1
      %p62 = por %p60, %p61
      %p64 = scmp.ne.s32.totalorder %s47, %s63
      %p65 = scmp.eq.s32.totalorder %s25, 0
      %p66 = por %p64, %p65
      %s68 = sadd.s32 %s67, 1
      %p71 = scmp.eq.s32.totalorder %s19, 1
      %p72 = scmp.ne.s32.totalorder %s67, %s69
      %p73 = scmp.eq.s32.totalorder %s19, 0
      %p74 = por %p72, %p73
      %p75 = scmp.ne.s32.totalorder %s67, %s69
      %p76 = scmp.eq.s32.totalorder %s24, 1
      %p77 = por %p75, %p76
      %p78 = scmp.ne.s32.totalorder %s69, %s70
      %p79 = scmp.eq.s32.totalorder %s24, 0
      %p80 = por %p78, %p79
      %p81 = scmp.ne.s32.totalorder %s69, %s70
      %p82 = scmp.eq.s32.totalorder %s25, 1
      %p83 = por %p81, %p82
      %p85 = scmp.ne.s32.totalorder %s70, %s84
      %p86 = scmp.eq.s32.totalorder %s25, 0
      %p87 = por %p85, %p86
      %s89 = sadd.s32 %s88, 1
      %p92 = scmp.eq.s32.totalorder %s19, 1
      %p93 = scmp.ne.s32.totalorder %s88, %s90
      %p94 = scmp.eq.s32.totalorder %s19, 0
      %p95 = por %p93, %p94
      %p96 = scmp.ne.s32.totalorder %s88, %s90
      %p97 = scmp.eq.s32.totalorder %s24, 1
      %p98 = por %p96, %p97
      %p99 = scmp.ne.s32.totalorder %s90, %s91
      %p100 = scmp.eq.s32.totalorder %s24, 0
      %p101 = por %p99, %p100
      %p102 = scmp.ne.s32.totalorder %s90, %s91
      %p103 = scmp.eq.s32.totalorder %s25, 1
      %p104 = por %p102, %p103
      %p106 = scmp.ne.s32.totalorder %s91, %s105
      %p107 = scmp.eq.s32.totalorder %s25, 0
      %p108 = por %p106, %p107
      %s110 = sadd.s32 %s109, 1
      %p113 = scmp.eq.s32.totalorder %s19, 1
      %p114 = scmp.ne.s32.totalorder %s109, %s111
      %p115 = scmp.eq.s32.totalorder %s19, 0
      %p116 = por %p114, %p115
      %p117 = scmp.ne.s32.totalorder %s109, %s111
      %p118 = scmp.eq.s32.totalorder %s24, 1
      %p119 = por %p117, %p118
      %p120 = scmp.ne.s32.totalorder %s111, %s112
      %p121 = scmp.eq.s32.totalorder %s24, 0
      %p122 = por %p120, %p121
      %p123 = scmp.ne.s32.totalorder %s111, %s112
      %p124 = scmp.eq.s32.totalorder %s25, 1
      %p125 = por %p123, %p124
      %p127 = scmp.ne.s32.totalorder %s112, %s126
      %p128 = scmp.eq.s32.totalorder %s25, 0
      %p129 = por %p127, %p128
      %s131 = sadd.s32 %s130, 1
      %p134 = scmp.eq.s32.totalorder %s19, 1
      %p135 = scmp.ne.s32.totalorder %s130, %s132
      %p136 = scmp.eq.s32.totalorder %s19, 0
      %p137 = por %p135, %p136
      %p138 = scmp.ne.s32.totalorder %s130, %s132
      %p139 = scmp.eq.s32.totalorder %s24, 1
      %p140 = por %p138, %p139
      %p141 = scmp.ne.s32.totalorder %s132, %s133
      %p142 = scmp.eq.s32.totalorder %s24, 0
      %p143 = por %p141, %p142
      %p144 = scmp.ne.s32.totalorder %s132, %s133
      %p145 = scmp.eq.s32.totalorder %s25, 1
      %p146 = por %p144, %p145
      %p148 = scmp.ne.s32.totalorder %s133, %s147
      %p149 = scmp.eq.s32.totalorder %s25, 0
      %p150 = por %p148, %p149
      %s151 = ssub.s32 %s26, %s38
      %s152 = ssub.s32 %s27, %s34
      %s153 = sor.u32 %s151, %s152
      %p154 = scmp.eq.s32.totalorder %s153, 0
      %s156 = sadd.s32 %s155, 1
      %s157 = scalar_select %p154, %s155, %s156
      %p160 = pneg %p154
      %p161 = scmp.eq.s32.totalorder %s19, 1
      %p162 = por %p160, %p161
      %p163 = scmp.ne.s32.totalorder %s155, %s158
      %p164 = scmp.eq.s32.totalorder %s19, 0
      %p165 = por %p163, %p164
      %p166 = scmp.ne.s32.totalorder %s155, %s158
      %p167 = scmp.eq.s32.totalorder %s24, 1
      %p168 = por %p166, %p167
      %p169 = scmp.ne.s32.totalorder %s158, %s159
      %p170 = scmp.eq.s32.totalorder %s24, 0
      %p171 = por %p169, %p170
      %p172 = scmp.ne.s32.totalorder %s158, %s159
      %p173 = scmp.eq.s32.totalorder %s25, 1
      %p174 = por %p172, %p173
      %p176 = scmp.ne.s32.totalorder %s159, %s175
      %p177 = scmp.eq.s32.totalorder %s25, 0
      %p178 = por %p176, %p177
      %p179 = scmp.le.s32.totalorder 1, %s19
      %p180 = scmp.lt.s32.totalorder %s19, 3
      %p181 = pnand %p179, %p180
      %p182 = pneg %p181
      // Predicated region
      $region9: #{sep_head_forward.1} parent=5 // pred_check
        _
      $region10: #{sep_head_forward.1} parent=5 // pred_check_branch
        %184 = sbr.rel (%p181) target = $region12
      $region11: #{sep_head_forward.1} parent=5 // pred_region
        %s185 = ssub.s32 %s19, 1
        // Predicated region
        $region13: #{sep_head_forward.1} parent=11 // pred_check
          %p186 = pneg %p80
        $region14: #{sep_head_forward.1} parent=11 // pred_check_branch
          %188 = sbr.rel (%p186) target = $region16
        $region15: #{sep_head_forward.1} parent=11 // pred_region
          %s190 = ssub.s32 3072, 3072
          %191 = vsyncadd [#allocation6], %s190
          %s192 = sshll.u32 [#allocation5], 4
          %s193 = int_to_ptr.vmem [resolvable:$true] %s192
          %198 = dma.hbm_to_vmem [thread:$0]  %s1, 3072, %s193, [#allocation6], 64, 64, 4
        $region16: #{sep_head_forward.1} parent=11 // pred_fallthru
          _
        // Predicated region
        $region17: #{sep_head_forward.1} parent=11 // pred_check
          %p199 = pneg %p101
        $region18: #{sep_head_forward.1} parent=11 // pred_check_branch
          %201 = sbr.rel (%p199) target = $region20
        $region19: #{sep_head_forward.1} parent=11 // pred_region
          %s203 = ssub.s32 6144, 6144
          %204 = vsyncadd [#allocation6], %s203
          %s205 = sshll.u32 [#allocation7], 4
          %s206 = int_to_ptr.vmem [resolvable:$true] %s205
          %211 = dma.hbm_to_vmem [thread:$0]  %s2, 6144, %s206, [#allocation6], 128, 128, 8
        $region20: #{sep_head_forward.1} parent=11 // pred_fallthru
          _
        // Predicated region
        $region21: #{sep_head_forward.1} parent=11 // pred_check
          %p212 = pneg %p122
        $region22: #{sep_head_forward.1} parent=11 // pred_check_branch
          %214 = sbr.rel (%p212) target = $region24
        $region23: #{sep_head_forward.1} parent=11 // pred_region
          %s216 = ssub.s32 384, 384
          %217 = vsyncadd [#allocation9], %s216
          %s218 = sshll.u32 [#allocation8], 4
          %s219 = int_to_ptr.vmem [resolvable:$true] %s218
          %224 = dma.hbm_to_vmem [thread:$0]  %s3, 384, %s219, [#allocation9], 192, 192, 12
        $region24: #{sep_head_forward.1} parent=11 // pred_fallthru
          _
        // Predicated region
        $region25: #{sep_head_forward.1} parent=11 // pred_check
          %p225 = pneg %p143
        $region26: #{sep_head_forward.1} parent=11 // pred_check_branch
          %227 = sbr.rel (%p225) target = $region28
        $region27: #{sep_head_forward.1} parent=11 // pred_region
          %s229 = ssub.s32 256, 256
          %230 = vsyncadd [#allocation9], %s229
          %s231 = sshll.u32 [#allocation10], 4
          %s232 = int_to_ptr.vmem [resolvable:$true] %s231
          %237 = dma.hbm_to_vmem [thread:$0]  %s4, 256, %s232, [#allocation9], 128, 128, 8
        $region28: #{sep_head_forward.1} parent=11 // pred_fallthru
          _
      $region12: #{sep_head_forward.1} parent=5 // pred_fallthru
        _
      %p238 = scmp.lt.s32.totalorder %s19, 2
      // Predicated region
      $region29: #{sep_head_forward.1} parent=5 // pred_check
        %p239 = pneg %p238
      $region30: #{sep_head_forward.1} parent=5 // pred_check_branch
        %241 = sbr.rel (%p239) target = $region32
      $region31: #{sep_head_forward.1} parent=5 // pred_region
        // Predicated region
        $region33: #{sep_head_forward.1} parent=31 // pred_check
          %p242 = pneg %p53
        $region34: #{sep_head_forward.1} parent=31 // pred_check_branch
          %244 = sbr.rel (%p242) target = $region36
        $region35: #{sep_head_forward.1} parent=31 // pred_region
          %s245 = sand.u32 %s43, 1
          %s246 = scalar_lea.sflag [#allocation3], %s245
          %s247 = sand.u32 %s43, 1
          %s248 = smul.addr %s247, 64
          %s249 = scalar_lea.vmem [#allocation2], %s248
          %s250 = smul.u32 2, %s27
          %s252 = ssub.s32 1024, 1024
          %253 = vsyncadd %s246, %s252
          %s254 = smul.addr %s26, 8
          %s255 = sadd.s32 %s250, %s254
          %s256 = smul.addr %s255, 128
          %s257 = scalar_lea.hbm %s0, %s256
          %s258 = sshll.u32 %s249, 4
          %s259 = int_to_ptr.vmem [resolvable:$true] %s258
          %264 = dma.hbm_to_vmem [thread:$0]  %s257, 1024, %s259, %s246, 256, 256, 16
        $region36: #{sep_head_forward.1} parent=31 // pred_fallthru
          _
      $region32: #{sep_head_forward.1} parent=5 // pred_fallthru
        _
      %p265 = scmp.le.s32.totalorder 1, %s19
      %p266 = scmp.lt.s32.totalorder %s19, 3
      %p267 = pnand %p265, %p266
      %p268 = pneg %p267
      // Predicated region
      $region37: #{sep_head_forward.1} parent=5 // pred_check
        _
      $region38: #{sep_head_forward.1} parent=5 // pred_check_branch
        %270 = sbr.rel (%p267) target = $region40
      $region39: #{sep_head_forward.1} parent=5 // pred_region
        %s271 = ssub.s32 %s19, 1
        %s272 = sand.u32 %s46, 1
        %s273 = scalar_lea.sflag [#allocation3], %s272
        %s274 = sand.u32 %s46, 1
        %s275 = smul.addr %s274, 64
        %s276 = scalar_lea.vmem [#allocation2], %s275
        // Predicated region
        $region41: #{sep_head_forward.1} parent=39 // pred_check
          %p277 = pneg %p59
        $region42: #{sep_head_forward.1} parent=39 // pred_check_branch
          %279 = sbr.rel (%p277) target = $region44
        $region43: #{sep_head_forward.1} parent=39 // pred_region
          %280 = dma.done %s273, 1024
        $region44: #{sep_head_forward.1} parent=39 // pred_fallthru
          _
        // Predicated region
        $region45: #{sep_head_forward.1} parent=39 // pred_check
          %p281 = pneg %p80
        $region46: #{sep_head_forward.1} parent=39 // pred_check_branch
          %283 = sbr.rel (%p281) target = $region48
        $region47: #{sep_head_forward.1} parent=39 // pred_region
          %284 = dma.done [#allocation6], 3072
        $region48: #{sep_head_forward.1} parent=39 // pred_fallthru
          _
        // Predicated region
        $region49: #{sep_head_forward.1} parent=39 // pred_check
          %p285 = pneg %p101
        $region50: #{sep_head_forward.1} parent=39 // pred_check_branch
          %287 = sbr.rel (%p285) target = $region52
        $region51: #{sep_head_forward.1} parent=39 // pred_region
          %288 = dma.done [#allocation6], 6144
        $region52: #{sep_head_forward.1} parent=39 // pred_fallthru
          _
        // Predicated region
        $region53: #{sep_head_forward.1} parent=39 // pred_check
          %p289 = pneg %p122
        $region54: #{sep_head_forward.1} parent=39 // pred_check_branch
          %291 = sbr.rel (%p289) target = $region56
        $region55: #{sep_head_forward.1} parent=39 // pred_region
          %292 = dma.done [#allocation9], 384
        $region56: #{sep_head_forward.1} parent=39 // pred_fallthru
          _
        // Predicated region
        $region57: #{sep_head_forward.1} parent=39 // pred_check
          %p293 = pneg %p143
        $region58: #{sep_head_forward.1} parent=39 // pred_check_branch
          %295 = sbr.rel (%p293) target = $region60
        $region59: #{sep_head_forward.1} parent=39 // pred_region
          %296 = dma.done [#allocation9], 256
        $region60: #{sep_head_forward.1} parent=39 // pred_fallthru
          _
        %s297 = sand.u32 %s46, 1
        %s298 = scalar_lea.sflag [#allocation3], %s297
        %s299 = sand.u32 %s46, 1
        %s300 = smul.addr %s299, 64
        %s301 = scalar_lea.vmem [#allocation2], %s300
        %p302 = pneg %p59
        %p303 = pneg %p56
        %p304 = pneg %p80
        %p305 = pneg %p77
        %p306 = pneg %p101
        %p307 = pneg %p98
        %p308 = pneg %p122
        %p309 = pneg %p119
        %p310 = pneg %p143
        %p311 = pneg %p140
        %p312 = pneg %p171
        %p313 = pneg %p168
        %s314 = sand.u32 %s158, 1
        %s315 = scalar_lea.sflag [#allocation4], %s314
        %s316 = sand.u32 %s158, 1
        %s317 = smul.addr %s316, 32
        %s318 = scalar_lea.vmem [#allocation11], %s317
        %s319 = smul.u32 2, %s29
        %s320 = smul.u32 2, %s29
        %v322 = vld [vmem:[%s276] sm:$0xff]
        %v323 = vld [vmem:[%s276 + $0x8] sm:$0xff]
        %v324 = vld [vmem:[%s276 + $0x10] sm:$0xff]
        %v325 = vld [vmem:[%s276 + $0x18] sm:$0xff]
        %v326 = vld [vmem:[%s276 + $0x20] sm:$0xff]
        %v327 = vld [vmem:[%s276 + $0x28] sm:$0xff]
        %v328 = vld [vmem:[%s276 + $0x30] sm:$0xff]
        %v329 = vld [vmem:[%s276 + $0x38] sm:$0xff]
        %v330 = vpack.c.bf16 %v324, %v322
        %v331 = vpack.c.bf16 %v325, %v323
        %v332 = vpack.c.bf16 %v328, %v326
        %v333 = vpack.c.bf16 %v329, %v327
        %v334 = vld [vmem:[#allocation5] sm:$0xf]
        %v335 = vld [vmem:[#allocation5 + $0x4] sm:$0xf]
        %v336 = vld [vmem:[#allocation5 + $0x8] sm:$0xf]
        %v337 = vld [vmem:[#allocation5 + $0xc] sm:$0xf]
        %v338 = vld [vmem:[#allocation5 + $0x10] sm:$0xf]
        %v339 = vld [vmem:[#allocation5 + $0x14] sm:$0xf]
        %v340 = vld [vmem:[#allocation5 + $0x18] sm:$0xf]
        %v341 = vld [vmem:[#allocation5 + $0x1c] sm:$0xf]
        %v342 = vld [vmem:[#allocation5 + $0x20] sm:$0xf]
        %v343 = vld [vmem:[#allocation5 + $0x24] sm:$0xf]
        %v344 = vld [vmem:[#allocation5 + $0x28] sm:$0xf]
        %v345 = vld [vmem:[#allocation5 + $0x2c] sm:$0xf]
        %v346 = vld [vmem:[#allocation5 + $0x30] sm:$0xf]
        %v347 = vld [vmem:[#allocation5 + $0x34] sm:$0xf]
        %v348 = vld [vmem:[#allocation5 + $0x38] sm:$0xf]
        %v349 = vld [vmem:[#allocation5 + $0x3c] sm:$0xf]
        %v350 = vld [vmem:[#allocation5 + $0x40] sm:$0xf]
        %v351 = vld [vmem:[#allocation5 + $0x44] sm:$0xf]
        %v352 = vld [vmem:[#allocation5 + $0x48] sm:$0xf]
        %v353 = vld [vmem:[#allocation5 + $0x4c] sm:$0xf]
        %v354 = vld [vmem:[#allocation5 + $0x50] sm:$0xf]
        %v355 = vld [vmem:[#allocation5 + $0x54] sm:$0xf]
        %v356 = vld [vmem:[#allocation5 + $0x58] sm:$0xf]
        %v357 = vld [vmem:[#allocation5 + $0x5c] sm:$0xf]
        %v358 = vld [vmem:[#allocation5 + $0x60] sm:$0xf]
        %v359 = vld [vmem:[#allocation5 + $0x64] sm:$0xf]
        %v360 = vld [vmem:[#allocation5 + $0x68] sm:$0xf]
        %v361 = vld [vmem:[#allocation5 + $0x6c] sm:$0xf]
        %v362 = vld [vmem:[#allocation5 + $0x70] sm:$0xf]
        %v363 = vld [vmem:[#allocation5 + $0x74] sm:$0xf]
        %v364 = vld [vmem:[#allocation5 + $0x78] sm:$0xf]
        %v365 = vld [vmem:[#allocation5 + $0x7c] sm:$0xf]
        %v366 = vld [vmem:[#allocation7] sm:$0xff]
        %v367 = vld [vmem:[#allocation7 + $0x8] sm:$0xff]
        %v368 = vld [vmem:[#allocation7 + $0x10] sm:$0xff]
        %v369 = vld [vmem:[#allocation7 + $0x18] sm:$0xff]
        %v370 = vld [vmem:[#allocation7 + $0x20] sm:$0xff]
        %v371 = vld [vmem:[#allocation7 + $0x28] sm:$0xff]
        %v372 = vld [vmem:[#allocation7 + $0x30] sm:$0xff]
        %v373 = vld [vmem:[#allocation7 + $0x38] sm:$0xff]
        %v374 = vld [vmem:[#allocation7 + $0x40] sm:$0xff]
        %v375 = vld [vmem:[#allocation7 + $0x48] sm:$0xff]
        %v376 = vld [vmem:[#allocation7 + $0x50] sm:$0xff]
        %v377 = vld [vmem:[#allocation7 + $0x58] sm:$0xff]
        %v378 = vld [vmem:[#allocation7 + $0x60] sm:$0xff]
        %v379 = vld [vmem:[#allocation7 + $0x68] sm:$0xff]
        %v380 = vld [vmem:[#allocation7 + $0x70] sm:$0xff]
        %v381 = vld [vmem:[#allocation7 + $0x78] sm:$0xff]
        %v382 = vld [vmem:[#allocation7 + $0x80] sm:$0xff]
        %v383 = vld [vmem:[#allocation7 + $0x88] sm:$0xff]
        %v384 = vld [vmem:[#allocation7 + $0x90] sm:$0xff]
        %v385 = vld [vmem:[#allocation7 + $0x98] sm:$0xff]
        %v386 = vld [vmem:[#allocation7 + $0xa0] sm:$0xff]
        %v387 = vld [vmem:[#allocation7 + $0xa8] sm:$0xff]
        %v388 = vld [vmem:[#allocation7 + $0xb0] sm:$0xff]
        %v389 = vld [vmem:[#allocation7 + $0xb8] sm:$0xff]
        %v390 = vld [vmem:[#allocation7 + $0xc0] sm:$0xff]
        %v391 = vld [vmem:[#allocation7 + $0xc8] sm:$0xff]
        %v392 = vld [vmem:[#allocation7 + $0xd0] sm:$0xff]
        %v393 = vld [vmem:[#allocation7 + $0xd8] sm:$0xff]
        %v394 = vld [vmem:[#allocation7 + $0xe0] sm:$0xff]
        %v395 = vld [vmem:[#allocation7 + $0xe8] sm:$0xff]
        %v396 = vld [vmem:[#allocation7 + $0xf0] sm:$0xff]
        %v397 = vld [vmem:[#allocation7 + $0xf8] sm:$0xff]
        %399 = vset.pattern.permute.xlu0 0
        %400 = vperm.xlu0 %399, %v366
        %v401 = vpop.permute.xlu0 %400
        %404 = vset.pattern.permute.xlu0 0
        %405 = vperm.xlu0 %404, %v367
        %v406 = vpop.permute.xlu0 %405
        %409 = vset.pattern.permute.xlu0 0
        %410 = vperm.xlu0 %409, %v368
        %v411 = vpop.permute.xlu0 %410
        %414 = vset.pattern.permute.xlu0 0
        %415 = vperm.xlu0 %414, %v369
        %v416 = vpop.permute.xlu0 %415
        %419 = vset.pattern.permute.xlu0 0
        %420 = vperm.xlu0 %419, %v370
        %v421 = vpop.permute.xlu0 %420
        %424 = vset.pattern.permute.xlu0 0
        %425 = vperm.xlu0 %424, %v371
        %v426 = vpop.permute.xlu0 %425
        %429 = vset.pattern.permute.xlu0 0
        %430 = vperm.xlu0 %429, %v372
        %v431 = vpop.permute.xlu0 %430
        %434 = vset.pattern.permute.xlu0 0
        %435 = vperm.xlu0 %434, %v373
        %v436 = vpop.permute.xlu0 %435
        %439 = vset.pattern.permute.xlu0 0
        %440 = vperm.xlu0 %439, %v374
        %v441 = vpop.permute.xlu0 %440
        %444 = vset.pattern.permute.xlu0 0
        %445 = vperm.xlu0 %444, %v375
        %v446 = vpop.permute.xlu0 %445
        %449 = vset.pattern.permute.xlu0 0
        %450 = vperm.xlu0 %449, %v376
        %v451 = vpop.permute.xlu0 %450
        %454 = vset.pattern.permute.xlu0 0
        %455 = vperm.xlu0 %454, %v377
        %v456 = vpop.permute.xlu0 %455
        %459 = vset.pattern.permute.xlu0 0
        %460 = vperm.xlu0 %459, %v378
        %v461 = vpop.permute.xlu0 %460
        %464 = vset.pattern.permute.xlu0 0
        %465 = vperm.xlu0 %464, %v379
        %v466 = vpop.permute.xlu0 %465
        %469 = vset.pattern.permute.xlu0 0
        %470 = vperm.xlu0 %469, %v380
        %v471 = vpop.permute.xlu0 %470
        %474 = vset.pattern.permute.xlu0 0
        %475 = vperm.xlu0 %474, %v381
        %v476 = vpop.permute.xlu0 %475
        %479 = vset.pattern.permute.xlu0 0
        %480 = vperm.xlu0 %479, %v382
        %v481 = vpop.permute.xlu0 %480
        %484 = vset.pattern.permute.xlu0 0
        %485 = vperm.xlu0 %484, %v383
        %v486 = vpop.permute.xlu0 %485
        %489 = vset.pattern.permute.xlu0 0
        %490 = vperm.xlu0 %489, %v384
        %v491 = vpop.permute.xlu0 %490
        %494 = vset.pattern.permute.xlu0 0
        %495 = vperm.xlu0 %494, %v385
        %v496 = vpop.permute.xlu0 %495
        %499 = vset.pattern.permute.xlu0 0
        %500 = vperm.xlu0 %499, %v386
        %v501 = vpop.permute.xlu0 %500
        %504 = vset.pattern.permute.xlu0 0
        %505 = vperm.xlu0 %504, %v387
        %v506 = vpop.permute.xlu0 %505
        %509 = vset.pattern.permute.xlu0 0
        %510 = vperm.xlu0 %509, %v388
        %v511 = vpop.permute.xlu0 %510
        %514 = vset.pattern.permute.xlu0 0
        %515 = vperm.xlu0 %514, %v389
        %v516 = vpop.permute.xlu0 %515
        %519 = vset.pattern.permute.xlu0 0
        %520 = vperm.xlu0 %519, %v390
        %v521 = vpop.permute.xlu0 %520
        %524 = vset.pattern.permute.xlu0 0
        %525 = vperm.xlu0 %524, %v391
        %v526 = vpop.permute.xlu0 %525
        %529 = vset.pattern.permute.xlu0 0
        %530 = vperm.xlu0 %529, %v392
        %v531 = vpop.permute.xlu0 %530
        %534 = vset.pattern.permute.xlu0 0
        %535 = vperm.xlu0 %534, %v393
        %v536 = vpop.permute.xlu0 %535
        %539 = vset.pattern.permute.xlu0 0
        %540 = vperm.xlu0 %539, %v394
        %v541 = vpop.permute.xlu0 %540
        %544 = vset.pattern.permute.xlu0 0
        %545 = vperm.xlu0 %544, %v395
        %v546 = vpop.permute.xlu0 %545
        %549 = vset.pattern.permute.xlu0 0
        %550 = vperm.xlu0 %549, %v396
        %v551 = vpop.permute.xlu0 %550
        %554 = vset.pattern.permute.xlu0 0
        %555 = vperm.xlu0 %554, %v397
        %v556 = vpop.permute.xlu0 %555
        %v590 = vunpack.c.l.b16 %v334
        %v591 = vunpack.c.l.b16 %v335
        %v592 = vunpack.c.l.b16 %v336
        %v593 = vunpack.c.l.b16 %v337
        %v594 = vunpack.c.l.b16 %v338
        %v595 = vunpack.c.l.b16 %v339
        %v596 = vunpack.c.l.b16 %v340
        %v597 = vunpack.c.l.b16 %v341
        %v598 = vunpack.c.l.b16 %v342
        %v599 = vunpack.c.l.b16 %v343
        %v600 = vunpack.c.l.b16 %v344
        %v601 = vunpack.c.l.b16 %v345
        %v602 = vunpack.c.l.b16 %v346
        %v603 = vunpack.c.l.b16 %v347
        %v604 = vunpack.c.l.b16 %v348
        %v605 = vunpack.c.l.b16 %v349
        %v606 = vunpack.c.l.b16 %v350
        %v607 = vunpack.c.l.b16 %v351
        %v608 = vunpack.c.l.b16 %v352
        %v609 = vunpack.c.l.b16 %v353
        %v610 = vunpack.c.l.b16 %v354
        %v611 = vunpack.c.l.b16 %v355
        %v612 = vunpack.c.l.b16 %v356
        %v613 = vunpack.c.l.b16 %v357
        %v614 = vunpack.c.l.b16 %v358
        %v615 = vunpack.c.l.b16 %v359
        %v616 = vunpack.c.l.b16 %v360
        %v617 = vunpack.c.l.b16 %v361
        %v618 = vunpack.c.l.b16 %v362
        %v619 = vunpack.c.l.b16 %v363
        %v620 = vunpack.c.l.b16 %v364
        %v621 = vunpack.c.l.b16 %v365
        %v622 = vpack.c.b16 %v591, %v590
        %v623 = vpack.c.b16 %v593, %v592
        %v624 = vpack.c.b16 %v595, %v594
        %v625 = vpack.c.b16 %v597, %v596
        %v626 = vpack.c.b16 %v599, %v598
        %v627 = vpack.c.b16 %v601, %v600
        %v628 = vpack.c.b16 %v603, %v602
        %v629 = vpack.c.b16 %v605, %v604
        %v630 = vpack.c.b16 %v607, %v606
        %v631 = vpack.c.b16 %v609, %v608
        %v632 = vpack.c.b16 %v611, %v610
        %v633 = vpack.c.b16 %v613, %v612
        %v634 = vpack.c.b16 %v615, %v614
        %v635 = vpack.c.b16 %v617, %v616
        %v636 = vpack.c.b16 %v619, %v618
        %v637 = vpack.c.b16 %v621, %v620
        %vm638 = vcmask 261120
        %v640 = vsel %vm638, %v622, 0
        %v643 = vsel %vm638, %v623, 0
        %v646 = vsel %vm638, %v624, 0
        %v649 = vsel %vm638, %v625, 0
        %v652 = vsel %vm638, %v626, 0
        %v655 = vsel %vm638, %v627, 0
        %v658 = vsel %vm638, %v628, 0
        %v661 = vsel %vm638, %v629, 0
        %v664 = vsel %vm638, %v630, 0
        %v667 = vsel %vm638, %v631, 0
        %v670 = vsel %vm638, %v632, 0
        %v673 = vsel %vm638, %v633, 0
        %v676 = vsel %vm638, %v634, 0
        %v679 = vsel %vm638, %v635, 0
        %v682 = vsel %vm638, %v636, 0
        %v685 = vsel %vm638, %v637, 0
        %687 = vmatprep.subr.bf16.mxu0 %v331
        %688 = vmatpush1.bf16.msra.mxu0 %v330
        %689 = vmatprep.subr.bf16.mxu0 %v333
        %690 = vmatpush1.bf16.msra.mxu0 %v332
        %691 = vmatprep.subr.bf16.mxu0 0
        %692 = vmatpush1.bf16.msra.mxu0 0
        %693 = vmatprep.subr.bf16.mxu0 0
        %694 = vmatpush1.bf16.msra.mxu0 0
        %695 = vmatprep.subr.bf16.mxu0 0
        %696 = vmatpush1.bf16.msra.mxu0 0
        %697 = vmatprep.subr.bf16.mxu0 0
        %698 = vmatpush1.bf16.msra.mxu0 0
        %699 = vmatprep.subr.bf16.mxu0 0
        %700 = vmatpush1.bf16.msra.mxu0 0
        %701 = vmatprep.subr.bf16.mxu0 0
        %702 = vmatpush1.bf16.msra.mxu0 0
        %703 = vmatprep.subr.bf16.mxu0 0
        %704 = vmatpush1.bf16.msra.mxu0 0
        %705 = vmatprep.subr.bf16.mxu0 0
        %706 = vmatpush1.bf16.msra.mxu0 0
        %707 = vmatprep.subr.bf16.mxu0 0
        %708 = vmatpush1.bf16.msra.mxu0 0
        %709 = vmatprep.subr.bf16.mxu0 0
        %710 = vmatpush1.bf16.msra.mxu0 0
        %711 = vmatprep.subr.bf16.mxu0 0
        %712 = vmatpush1.bf16.msra.mxu0 0
        %713 = vmatprep.subr.bf16.mxu0 0
        %714 = vmatpush1.bf16.msra.mxu0 0
        %715 = vmatprep.subr.bf16.mxu0 0
        %716 = vmatpush1.bf16.msra.mxu0 0
        %717 = vmatprep.subr.bf16.mxu0 0
        %718 = vmatpush1.bf16.msra.mxu0 0
        %719 = vmatprep.mubr.bf16.mxu0 0
        %720 = vmatmul.mubr.bf16.gmra.mrb[0].mxu0 %v640
        %v721 = vpop.f32.mrb[0].mxu0
        %v722 = vadd.f32 %v401, %v721
        %v723 = vpop.f32.mrb[0].mxu0
        %v724 = vadd.f32 %v401, %v723
        %v725 = vpop.f32.mrb[0].mxu0
        %v726 = vadd.f32 %v406, %v725
        %v727 = vpop.f32.mrb[0].mxu0
        %v728 = vadd.f32 %v406, %v727
        %729 = vmatprep.mubr.bf16.mxu0 0
        %730 = vmatmul.mubr.bf16.gmra.mrb[0].mxu0 %v643
        %v731 = vpop.f32.mrb[0].mxu0
        %v732 = vadd.f32 %v411, %v731
        %v733 = vpop.f32.mrb[0].mxu0
        %v734 = vadd.f32 %v411, %v733
        %v735 = vpop.f32.mrb[0].mxu0
        %v736 = vadd.f32 %v416, %v735
        %v737 = vpop.f32.mrb[0].mxu0
        %v738 = vadd.f32 %v416, %v737
        %739 = vmatprep.mubr.bf16.mxu0 0
        %740 = vmatmul.mubr.bf16.gmra.mrb[0].mxu0 %v646
        %v741 = vpop.f32.mrb[0].mxu0
        %v742 = vadd.f32 %v421, %v741
        %v743 = vpop.f32.mrb[0].mxu0
        %v744 = vadd.f32 %v421, %v743
        %v745 = vpop.f32.mrb[0].mxu0
        %v746 = vadd.f32 %v426, %v745
        %v747 = vpop.f32.mrb[0].mxu0
        %v748 = vadd.f32 %v426, %v747
        %749 = vmatprep.mubr.bf16.mxu0 0
        %750 = vmatmul.mubr.bf16.gmra.mrb[0].mxu0 %v649
        %v751 = vpop.f32.mrb[0].mxu0
        %v752 = vadd.f32 %v431, %v751
        %v753 = vpop.f32.mrb[0].mxu0
        %v754 = vadd.f32 %v431, %v753
        %v755 = vpop.f32.mrb[0].mxu0
        %v756 = vadd.f32 %v436, %v755
        %v757 = vpop.f32.mrb[0].mxu0
        %v758 = vadd.f32 %v436, %v757
        %759 = vmatprep.mubr.bf16.mxu0 0
        %760 = vmatmul.mubr.bf16.gmra.mrb[0].mxu0 %v652
        %v761 = vpop.f32.mrb[0].mxu0
        %v762 = vadd.f32 %v441, %v761
        %v763 = vpop.f32.mrb[0].mxu0
        %v764 = vadd.f32 %v441, %v763
        %v765 = vpop.f32.mrb[0].mxu0
        %v766 = vadd.f32 %v446, %v765
        %v767 = vpop.f32.mrb[0].mxu0
        %v768 = vadd.f32 %v446, %v767
        %769 = vmatprep.mubr.bf16.mxu0 0
        %770 = vmatmul.mubr.bf16.gmra.mrb[0].mxu0 %v655
        %v771 = vpop.f32.mrb[0].mxu0
        %v772 = vadd.f32 %v451, %v771
        %v773 = vpop.f32.mrb[0].mxu0
        %v774 = vadd.f32 %v451, %v773
        %v775 = vpop.f32.mrb[0].mxu0
        %v776 = vadd.f32 %v456, %v775
        %v777 = vpop.f32.mrb[0].mxu0
        %v778 = vadd.f32 %v456, %v777
        %779 = vmatprep.mubr.bf16.mxu0 0
        %780 = vmatmul.mubr.bf16.gmra.mrb[0].mxu0 %v658
        %v781 = vpop.f32.mrb[0].mxu0
        %v782 = vadd.f32 %v461, %v781
        %v783 = vpop.f32.mrb[0].mxu0
        %v784 = vadd.f32 %v461, %v783
        %v785 = vpop.f32.mrb[0].mxu0
        %v786 = vadd.f32 %v466, %v785
        %v787 = vpop.f32.mrb[0].mxu0
        %v788 = vadd.f32 %v466, %v787
        %789 = vmatprep.mubr.bf16.mxu0 0
        %790 = vmatmul.mubr.bf16.gmra.mrb[0].mxu0 %v661
        %v791 = vpop.f32.mrb[0].mxu0
        %v792 = vadd.f32 %v471, %v791
        %v793 = vpop.f32.mrb[0].mxu0
        %v794 = vadd.f32 %v471, %v793
        %v795 = vpop.f32.mrb[0].mxu0
        %v796 = vadd.f32 %v476, %v795
        %v797 = vpop.f32.mrb[0].mxu0
        %v798 = vadd.f32 %v476, %v797
        %799 = vmatprep.mubr.bf16.mxu0 0
        %800 = vmatmul.mubr.bf16.gmra.mrb[0].mxu0 %v664
        %v801 = vpop.f32.mrb[0].mxu0
        %v802 = vadd.f32 %v481, %v801
        %v803 = vpop.f32.mrb[0].mxu0
        %v804 = vadd.f32 %v481, %v803
        %v805 = vpop.f32.mrb[0].mxu0
        %v806 = vadd.f32 %v486, %v805
        %v807 = vpop.f32.mrb[0].mxu0
        %v808 = vadd.f32 %v486, %v807
        %809 = vmatprep.mubr.bf16.mxu0 0
        %810 = vmatmul.mubr.bf16.gmra.mrb[0].mxu0 %v667
        %v811 = vpop.f32.mrb[0].mxu0
        %v812 = vadd.f32 %v491, %v811
        %v813 = vpop.f32.mrb[0].mxu0
        %v814 = vadd.f32 %v491, %v813
        %v815 = vpop.f32.mrb[0].mxu0
        %v816 = vadd.f32 %v496, %v815
        %v817 = vpop.f32.mrb[0].mxu0
        %v818 = vadd.f32 %v496, %v817
        %819 = vmatprep.mubr.bf16.mxu0 0
        %820 = vmatmul.mubr.bf16.gmra.mrb[0].mxu0 %v670
        %v821 = vpop.f32.mrb[0].mxu0
        %v822 = vadd.f32 %v501, %v821
        %v823 = vpop.f32.mrb[0].mxu0
        %v824 = vadd.f32 %v501, %v823
        %v825 = vpop.f32.mrb[0].mxu0
        %v826 = vadd.f32 %v506, %v825
        %v827 = vpop.f32.mrb[0].mxu0
        %v828 = vadd.f32 %v506, %v827
        %829 = vmatprep.mubr.bf16.mxu0 0
        %830 = vmatmul.mubr.bf16.gmra.mrb[0].mxu0 %v673
        %v831 = vpop.f32.mrb[0].mxu0
        %v832 = vadd.f32 %v511, %v831
        %v833 = vpop.f32.mrb[0].mxu0
        %v834 = vadd.f32 %v511, %v833
        %v835 = vpop.f32.mrb[0].mxu0
        %v836 = vadd.f32 %v516, %v835
        %v837 = vpop.f32.mrb[0].mxu0
        %v838 = vadd.f32 %v516, %v837
        %839 = vmatprep.mubr.bf16.mxu0 0
        %840 = vmatmul.mubr.bf16.gmra.mrb[0].mxu0 %v676
        %v841 = vpop.f32.mrb[0].mxu0
        %v842 = vadd.f32 %v521, %v841
        %v843 = vpop.f32.mrb[0].mxu0
        %v844 = vadd.f32 %v521, %v843
        %v845 = vpop.f32.mrb[0].mxu0
        %v846 = vadd.f32 %v526, %v845
        %v847 = vpop.f32.mrb[0].mxu0
        %v848 = vadd.f32 %v526, %v847
        %849 = vmatprep.mubr.bf16.mxu0 0
        %850 = vmatmul.mubr.bf16.gmra.mrb[0].mxu0 %v679
        %v851 = vpop.f32.mrb[0].mxu0
        %v852 = vadd.f32 %v531, %v851
        %v853 = vpop.f32.mrb[0].mxu0
        %v854 = vadd.f32 %v531, %v853
        %v855 = vpop.f32.mrb[0].mxu0
        %v856 = vadd.f32 %v536, %v855
        %v857 = vpop.f32.mrb[0].mxu0
        %v858 = vadd.f32 %v536, %v857
        %859 = vmatprep.mubr.bf16.mxu0 0
        %860 = vmatmul.mubr.bf16.gmra.mrb[0].mxu0 %v682
        %v861 = vpop.f32.mrb[0].mxu0
        %v862 = vadd.f32 %v541, %v861
        %v863 = vpop.f32.mrb[0].mxu0
        %v864 = vadd.f32 %v541, %v863
        %v865 = vpop.f32.mrb[0].mxu0
        %v866 = vadd.f32 %v546, %v865
        %v867 = vpop.f32.mrb[0].mxu0
        %v868 = vadd.f32 %v546, %v867
        %869 = vmatprep.mubr.bf16.mxu0 0
        %870 = vmatmul.mubr.bf16.gmra.mrb[0].mxu0 %v685
        %v871 = vpop.f32.mrb[0].mxu0
        %v872 = vadd.f32 %v551, %v871
        %v873 = vpop.f32.mrb[0].mxu0
        %v874 = vadd.f32 %v551, %v873
        %v875 = vpop.f32.mrb[0].mxu0
        %v876 = vadd.f32 %v556, %v875
        %v877 = vpop.f32.mrb[0].mxu0
        %v878 = vadd.f32 %v556, %v877
        %879 = vdwg.mxu0
        %v880 = vmax.f32 %v722, 0.0
        %v881 = vmax.f32 %v724, 0.0
        %v882 = vmax.f32 %v726, 0.0
        %v883 = vmax.f32 %v728, 0.0
        %v884 = vmax.f32 %v732, 0.0
        %v885 = vmax.f32 %v734, 0.0
        %v886 = vmax.f32 %v736, 0.0
        %v887 = vmax.f32 %v738, 0.0
        %v888 = vmax.f32 %v742, 0.0
        %v889 = vmax.f32 %v744, 0.0
        %v890 = vmax.f32 %v746, 0.0
        %v891 = vmax.f32 %v748, 0.0
        %v892 = vmax.f32 %v752, 0.0
        %v893 = vmax.f32 %v754, 0.0
        %v894 = vmax.f32 %v756, 0.0
        %v895 = vmax.f32 %v758, 0.0
        %v896 = vmax.f32 %v762, 0.0
        %v897 = vmax.f32 %v764, 0.0
        %v898 = vmax.f32 %v766, 0.0
        %v899 = vmax.f32 %v768, 0.0
        %v900 = vmax.f32 %v772, 0.0
        %v901 = vmax.f32 %v774, 0.0
        %v902 = vmax.f32 %v776, 0.0
        %v903 = vmax.f32 %v778, 0.0
        %v904 = vmax.f32 %v782, 0.0
        %v905 = vmax.f32 %v784, 0.0
        %v906 = vmax.f32 %v786, 0.0
        %v907 = vmax.f32 %v788, 0.0
        %v908 = vmax.f32 %v792, 0.0
        %v909 = vmax.f32 %v794, 0.0
        %v910 = vmax.f32 %v796, 0.0
        %v911 = vmax.f32 %v798, 0.0
        %v912 = vmax.f32 %v802, 0.0
        %v913 = vmax.f32 %v804, 0.0
        %v914 = vmax.f32 %v806, 0.0
        %v915 = vmax.f32 %v808, 0.0
        %v916 = vmax.f32 %v812, 0.0
        %v917 = vmax.f32 %v814, 0.0
        %v918 = vmax.f32 %v816, 0.0
        %v919 = vmax.f32 %v818, 0.0
        %v920 = vmax.f32 %v822, 0.0
        %v921 = vmax.f32 %v824, 0.0
        %v922 = vmax.f32 %v826, 0.0
        %v923 = vmax.f32 %v828, 0.0
        %v924 = vmax.f32 %v832, 0.0
        %v925 = vmax.f32 %v834, 0.0
        %v926 = vmax.f32 %v836, 0.0
        %v927 = vmax.f32 %v838, 0.0
        %v928 = vmax.f32 %v842, 0.0
        %v929 = vmax.f32 %v844, 0.0
        %v930 = vmax.f32 %v846, 0.0
        %v931 = vmax.f32 %v848, 0.0
        %v932 = vmax.f32 %v852, 0.0
        %v933 = vmax.f32 %v854, 0.0
        %v934 = vmax.f32 %v856, 0.0
        %v935 = vmax.f32 %v858, 0.0
        %v936 = vmax.f32 %v862, 0.0
        %v937 = vmax.f32 %v864, 0.0
        %v938 = vmax.f32 %v866, 0.0
        %v939 = vmax.f32 %v868, 0.0
        %v940 = vmax.f32 %v872, 0.0
        %v941 = vmax.f32 %v874, 0.0
        %v942 = vmax.f32 %v876, 0.0
        %v943 = vmax.f32 %v878, 0.0
        %v944 = vpack.c.bf16 %v882, %v880
        %v945 = vpack.c.bf16 %v883, %v881
        %v946 = vpack.c.bf16 %v886, %v884
        %v947 = vpack.c.bf16 %v887, %v885
        %v948 = vpack.c.bf16 %v890, %v888
        %v949 = vpack.c.bf16 %v891, %v889
        %v950 = vpack.c.bf16 %v894, %v892
        %v951 = vpack.c.bf16 %v895, %v893
        %v952 = vpack.c.bf16 %v898, %v896
        %v953 = vpack.c.bf16 %v899, %v897
        %v954 = vpack.c.bf16 %v902, %v900
        %v955 = vpack.c.bf16 %v903, %v901
        %v956 = vpack.c.bf16 %v906, %v904
        %v957 = vpack.c.bf16 %v907, %v905
        %v958 = vpack.c.bf16 %v910, %v908
        %v959 = vpack.c.bf16 %v911, %v909
        %v960 = vpack.c.bf16 %v914, %v912
        %v961 = vpack.c.bf16 %v915, %v913
        %v962 = vpack.c.bf16 %v918, %v916
        %v963 = vpack.c.bf16 %v919, %v917
        %v964 = vpack.c.bf16 %v922, %v920
        %v965 = vpack.c.bf16 %v923, %v921
        %v966 = vpack.c.bf16 %v926, %v924
        %v967 = vpack.c.bf16 %v927, %v925
        %v968 = vpack.c.bf16 %v930, %v928
        %v969 = vpack.c.bf16 %v931, %v929
        %v970 = vpack.c.bf16 %v934, %v932
        %v971 = vpack.c.bf16 %v935, %v933
        %v972 = vpack.c.bf16 %v938, %v936
        %v973 = vpack.c.bf16 %v939, %v937
        %v974 = vpack.c.bf16 %v942, %v940
        %v975 = vpack.c.bf16 %v943, %v941
        %v976 = vld [vmem:[#allocation8] sm:$0xff]
        %v977 = vld [vmem:[#allocation8 + $0xc] sm:$0x77]
        %v978 = vld [vmem:[#allocation5 + $0x80] sm:$0xf]
        %v979 = vld [vmem:[#allocation5 + $0x84] sm:$0xf]
        %v980 = vld [vmem:[#allocation5 + $0x88] sm:$0xf]
        %v981 = vld [vmem:[#allocation5 + $0x8c] sm:$0xf]
        %v982 = vld [vmem:[#allocation5 + $0x90] sm:$0xf]
        %v983 = vld [vmem:[#allocation5 + $0x94] sm:$0xf]
        %v984 = vld [vmem:[#allocation5 + $0x98] sm:$0xf]
        %v985 = vld [vmem:[#allocation5 + $0x9c] sm:$0xf]
        %v986 = vld [vmem:[#allocation5 + $0xa0] sm:$0xf]
        %v987 = vld [vmem:[#allocation5 + $0xa4] sm:$0xf]
        %v988 = vld [vmem:[#allocation5 + $0xa8] sm:$0xf]
        %v989 = vld [vmem:[#allocation5 + $0xac] sm:$0xf]
        %v990 = vld [vmem:[#allocation5 + $0xb0] sm:$0xf]
        %v991 = vld [vmem:[#allocation5 + $0xb4] sm:$0xf]
        %v992 = vld [vmem:[#allocation5 + $0xb8] sm:$0xf]
        %v993 = vld [vmem:[#allocation5 + $0xbc] sm:$0xf]
        %v994 = vld [vmem:[#allocation7 + $0x100] sm:$0xff]
        %v995 = vld [vmem:[#allocation7 + $0x108] sm:$0xff]
        %v996 = vld [vmem:[#allocation7 + $0x110] sm:$0xff]
        %v997 = vld [vmem:[#allocation7 + $0x118] sm:$0xff]
        %v998 = vld [vmem:[#allocation7 + $0x120] sm:$0xff]
        %v999 = vld [vmem:[#allocation7 + $0x128] sm:$0xff]
        %v1000 = vld [vmem:[#allocation7 + $0x130] sm:$0xff]
        %v1001 = vld [vmem:[#allocation7 + $0x138] sm:$0xff]
        %v1002 = vld [vmem:[#allocation7 + $0x140] sm:$0xff]
        %v1003 = vld [vmem:[#allocation7 + $0x148] sm:$0xff]
        %v1004 = vld [vmem:[#allocation7 + $0x150] sm:$0xff]
        %v1005 = vld [vmem:[#allocation7 + $0x158] sm:$0xff]
        %v1006 = vld [vmem:[#allocation7 + $0x160] sm:$0xff]
        %v1007 = vld [vmem:[#allocation7 + $0x168] sm:$0xff]
        %v1008 = vld [vmem:[#allocation7 + $0x170] sm:$0xff]
        %v1009 = vld [vmem:[#allocation7 + $0x178] sm:$0xff]
        %1011 = vset.pattern.permute.xlu0 0
        %1012 = vperm.xlu0 %1011, %v994
        %v1013 = vpop.permute.xlu0 %1012
        %1016 = vset.pattern.permute.xlu0 0
        %1017 = vperm.xlu0 %1016, %v995
        %v1018 = vpop.permute.xlu0 %1017
        %1021 = vset.pattern.permute.xlu0 0
        %1022 = vperm.xlu0 %1021, %v996
        %v1023 = vpop.permute.xlu0 %1022
        %1026 = vset.pattern.permute.xlu0 0
        %1027 = vperm.xlu0 %1026, %v997
        %v1028 = vpop.permute.xlu0 %1027
        %1031 = vset.pattern.permute.xlu0 0
        %1032 = vperm.xlu0 %1031, %v998
        %v1033 = vpop.permute.xlu0 %1032
        %1036 = vset.pattern.permute.xlu0 0
        %1037 = vperm.xlu0 %1036, %v999
        %v1038 = vpop.permute.xlu0 %1037
        %1041 = vset.pattern.permute.xlu0 0
        %1042 = vperm.xlu0 %1041, %v1000
        %v1043 = vpop.permute.xlu0 %1042
        %1046 = vset.pattern.permute.xlu0 0
        %1047 = vperm.xlu0 %1046, %v1001
        %v1048 = vpop.permute.xlu0 %1047
        %1051 = vset.pattern.permute.xlu0 0
        %1052 = vperm.xlu0 %1051, %v1002
        %v1053 = vpop.permute.xlu0 %1052
        %1056 = vset.pattern.permute.xlu0 0
        %1057 = vperm.xlu0 %1056, %v1003
        %v1058 = vpop.permute.xlu0 %1057
        %1061 = vset.pattern.permute.xlu0 0
        %1062 = vperm.xlu0 %1061, %v1004
        %v1063 = vpop.permute.xlu0 %1062
        %1066 = vset.pattern.permute.xlu0 0
        %1067 = vperm.xlu0 %1066, %v1005
        %v1068 = vpop.permute.xlu0 %1067
        %1071 = vset.pattern.permute.xlu0 0
        %1072 = vperm.xlu0 %1071, %v1006
        %v1073 = vpop.permute.xlu0 %1072
        %1076 = vset.pattern.permute.xlu0 0
        %1077 = vperm.xlu0 %1076, %v1007
        %v1078 = vpop.permute.xlu0 %1077
        %1081 = vset.pattern.permute.xlu0 0
        %1082 = vperm.xlu0 %1081, %v1008
        %v1083 = vpop.permute.xlu0 %1082
        %1086 = vset.pattern.permute.xlu0 0
        %1087 = vperm.xlu0 %1086, %v1009
        %v1088 = vpop.permute.xlu0 %1087
        %v1106 = vunpack.c.l.b16 %v978
        %v1107 = vunpack.c.l.b16 %v979
        %v1108 = vunpack.c.l.b16 %v980
        %v1109 = vunpack.c.l.b16 %v981
        %v1110 = vunpack.c.l.b16 %v982
        %v1111 = vunpack.c.l.b16 %v983
        %v1112 = vunpack.c.l.b16 %v984
        %v1113 = vunpack.c.l.b16 %v985
        %v1114 = vunpack.c.l.b16 %v986
        %v1115 = vunpack.c.l.b16 %v987
        %v1116 = vunpack.c.l.b16 %v988
        %v1117 = vunpack.c.l.b16 %v989
        %v1118 = vunpack.c.l.b16 %v990
        %v1119 = vunpack.c.l.b16 %v991
        %v1120 = vunpack.c.l.b16 %v992
        %v1121 = vunpack.c.l.b16 %v993
        %v1122 = vpack.c.b16 %v1107, %v1106
        %v1123 = vpack.c.b16 %v1109, %v1108
        %v1124 = vpack.c.b16 %v1111, %v1110
        %v1125 = vpack.c.b16 %v1113, %v1112
        %v1126 = vpack.c.b16 %v1115, %v1114
        %v1127 = vpack.c.b16 %v1117, %v1116
        %v1128 = vpack.c.b16 %v1119, %v1118
        %v1129 = vpack.c.b16 %v1121, %v1120
        %v1131 = vsel %vm638, %v1122, 0
        %v1134 = vsel %vm638, %v1123, 0
        %v1137 = vsel %vm638, %v1124, 0
        %v1140 = vsel %vm638, %v1125, 0
        %v1143 = vsel %vm638, %v1126, 0
        %v1146 = vsel %vm638, %v1127, 0
        %v1149 = vsel %vm638, %v1128, 0
        %v1152 = vsel %vm638, %v1129, 0
        %1154 = vmatprep.subr.bf16.mxu0 %v331
        %1155 = vmatpush1.bf16.msra.mxu0 %v330
        %1156 = vmatprep.subr.bf16.mxu0 %v333
        %1157 = vmatpush1.bf16.msra.mxu0 %v332
        %1158 = vmatprep.subr.bf16.mxu0 0
        %1159 = vmatpush1.bf16.msra.mxu0 0
        %1160 = vmatprep.subr.bf16.mxu0 0
        %1161 = vmatpush1.bf16.msra.mxu0 0
        %1162 = vmatprep.subr.bf16.mxu0 0
        %1163 = vmatpush1.bf16.msra.mxu0 0
        %1164 = vmatprep.subr.bf16.mxu0 0
        %1165 = vmatpush1.bf16.msra.mxu0 0
        %1166 = vmatprep.subr.bf16.mxu0 0
        %1167 = vmatpush1.bf16.msra.mxu0 0
        %1168 = vmatprep.subr.bf16.mxu0 0
        %1169 = vmatpush1.bf16.msra.mxu0 0
        %1170 = vmatprep.subr.bf16.mxu0 0
        %1171 = vmatpush1.bf16.msra.mxu0 0
        %1172 = vmatprep.subr.bf16.mxu0 0
        %1173 = vmatpush1.bf16.msra.mxu0 0
        %1174 = vmatprep.subr.bf16.mxu0 0
        %1175 = vmatpush1.bf16.msra.mxu0 0
        %1176 = vmatprep.subr.bf16.mxu0 0
        %1177 = vmatpush1.bf16.msra.mxu0 0
        %1178 = vmatprep.subr.bf16.mxu0 0
        %1179 = vmatpush1.bf16.msra.mxu0 0
        %1180 = vmatprep.subr.bf16.mxu0 0
        %1181 = vmatpush1.bf16.msra.mxu0 0
        %1182 = vmatprep.subr.bf16.mxu0 0
        %1183 = vmatpush1.bf16.msra.mxu0 0
        %1184 = vmatprep.subr.bf16.mxu0 0
        %1185 = vmatpush1.bf16.msra.mxu0 0
        %1186 = vmatprep.mubr.bf16.mxu0 0
        %1187 = vmatmul.mubr.bf16.gmra.mrb[0].mxu0 %v1131
        %v1188 = vpop.f32.mrb[0].mxu0
        %v1189 = vadd.f32 %v1013, %v1188
        %v1190 = vpop.f32.mrb[0].mxu0
        %v1191 = vadd.f32 %v1013, %v1190
        %v1192 = vpop.f32.mrb[0].mxu0
        %v1193 = vadd.f32 %v1018, %v1192
        %v1194 = vpop.f32.mrb[0].mxu0
        %v1195 = vadd.f32 %v1018, %v1194
        %1196 = vmatprep.mubr.bf16.mxu0 0
        %1197 = vmatmul.mubr.bf16.gmra.mrb[0].mxu0 %v1134
        %v1198 = vpop.f32.mrb[0].mxu0
        %v1199 = vadd.f32 %v1023, %v1198
        %v1200 = vpop.f32.mrb[0].mxu0
        %v1201 = vadd.f32 %v1023, %v1200
        %v1202 = vpop.f32.mrb[0].mxu0
        %v1203 = vadd.f32 %v1028, %v1202
        %v1204 = vpop.f32.mrb[0].mxu0
        %v1205 = vadd.f32 %v1028, %v1204
        %1206 = vmatprep.mubr.bf16.mxu0 0
        %1207 = vmatmul.mubr.bf16.gmra.mrb[0].mxu0 %v1137
        %v1208 = vpop.f32.mrb[0].mxu0
        %v1209 = vadd.f32 %v1033, %v1208
        %v1210 = vpop.f32.mrb[0].mxu0
        %v1211 = vadd.f32 %v1033, %v1210
        %v1212 = vpop.f32.mrb[0].mxu0
        %v1213 = vadd.f32 %v1038, %v1212
        %v1214 = vpop.f32.mrb[0].mxu0
        %v1215 = vadd.f32 %v1038, %v1214
        %1216 = vmatprep.mubr.bf16.mxu0 0
        %1217 = vmatmul.mubr.bf16.gmra.mrb[0].mxu0 %v1140
        %v1218 = vpop.f32.mrb[0].mxu0
        %v1219 = vadd.f32 %v1043, %v1218
        %v1220 = vpop.f32.mrb[0].mxu0
        %v1221 = vadd.f32 %v1043, %v1220
        %v1222 = vpop.f32.mrb[0].mxu0
        %v1223 = vadd.f32 %v1048, %v1222
        %v1224 = vpop.f32.mrb[0].mxu0
        %v1225 = vadd.f32 %v1048, %v1224
        %1226 = vmatprep.mubr.bf16.mxu0 0
        %1227 = vmatmul.mubr.bf16.gmra.mrb[0].mxu0 %v1143
        %v1228 = vpop.f32.mrb[0].mxu0
        %v1229 = vadd.f32 %v1053, %v1228
        %v1230 = vpop.f32.mrb[0].mxu0
        %v1231 = vadd.f32 %v1053, %v1230
        %v1232 = vpop.f32.mrb[0].mxu0
        %v1233 = vadd.f32 %v1058, %v1232
        %v1234 = vpop.f32.mrb[0].mxu0
        %v1235 = vadd.f32 %v1058, %v1234
        %1236 = vmatprep.mubr.bf16.mxu0 0
        %1237 = vmatmul.mubr.bf16.gmra.mrb[0].mxu0 %v1146
        %v1238 = vpop.f32.mrb[0].mxu0
        %v1239 = vadd.f32 %v1063, %v1238
        %v1240 = vpop.f32.mrb[0].mxu0
        %v1241 = vadd.f32 %v1063, %v1240
        %v1242 = vpop.f32.mrb[0].mxu0
        %v1243 = vadd.f32 %v1068, %v1242
        %v1244 = vpop.f32.mrb[0].mxu0
        %v1245 = vadd.f32 %v1068, %v1244
        %1246 = vmatprep.mubr.bf16.mxu0 0
        %1247 = vmatmul.mubr.bf16.gmra.mrb[0].mxu0 %v1149
        %v1248 = vpop.f32.mrb[0].mxu0
        %v1249 = vadd.f32 %v1073, %v1248
        %v1250 = vpop.f32.mrb[0].mxu0
        %v1251 = vadd.f32 %v1073, %v1250
        %v1252 = vpop.f32.mrb[0].mxu0
        %v1253 = vadd.f32 %v1078, %v1252
        %v1254 = vpop.f32.mrb[0].mxu0
        %v1255 = vadd.f32 %v1078, %v1254
        %1256 = vmatprep.mubr.bf16.mxu0 0
        %1257 = vmatmul.mubr.bf16.gmra.mrb[0].mxu0 %v1152
        %v1258 = vpop.f32.mrb[0].mxu0
        %v1259 = vadd.f32 %v1083, %v1258
        %v1260 = vpop.f32.mrb[0].mxu0
        %v1261 = vadd.f32 %v1083, %v1260
        %v1262 = vpop.f32.mrb[0].mxu0
        %v1263 = vadd.f32 %v1088, %v1262
        %v1264 = vpop.f32.mrb[0].mxu0
        %v1265 = vadd.f32 %v1088, %v1264
        %1266 = vdwg.mxu0
        %v1267 = vmax.f32 %v1189, 0.0
        %v1268 = vmax.f32 %v1191, 0.0
        %v1269 = vmax.f32 %v1193, 0.0
        %v1270 = vmax.f32 %v1195, 0.0
        %v1271 = vmax.f32 %v1199, 0.0
        %v1272 = vmax.f32 %v1201, 0.0
        %v1273 = vmax.f32 %v1203, 0.0
        %v1274 = vmax.f32 %v1205, 0.0
        %v1275 = vmax.f32 %v1209, 0.0
        %v1276 = vmax.f32 %v1211, 0.0
        %v1277 = vmax.f32 %v1213, 0.0
        %v1278 = vmax.f32 %v1215, 0.0
        %v1279 = vmax.f32 %v1219, 0.0
        %v1280 = vmax.f32 %v1221, 0.0
        %v1281 = vmax.f32 %v1223, 0.0
        %v1282 = vmax.f32 %v1225, 0.0
        %v1283 = vmax.f32 %v1229, 0.0
        %v1284 = vmax.f32 %v1231, 0.0
        %v1285 = vmax.f32 %v1233, 0.0
        %v1286 = vmax.f32 %v1235, 0.0
        %v1287 = vmax.f32 %v1239, 0.0
        %v1288 = vmax.f32 %v1241, 0.0
        %v1289 = vmax.f32 %v1243, 0.0
        %v1290 = vmax.f32 %v1245, 0.0
        %v1291 = vmax.f32 %v1249, 0.0
        %v1292 = vmax.f32 %v1251, 0.0
        %v1293 = vmax.f32 %v1253, 0.0
        %v1294 = vmax.f32 %v1255, 0.0
        %v1295 = vmax.f32 %v1259, 0.0
        %v1296 = vmax.f32 %v1261, 0.0
        %v1297 = vmax.f32 %v1263, 0.0
        %v1298 = vmax.f32 %v1265, 0.0
        %v1299 = vpack.c.bf16 %v1269, %v1267
        %v1300 = vpack.c.bf16 %v1270, %v1268
        %v1301 = vpack.c.bf16 %v1273, %v1271
        %v1302 = vpack.c.bf16 %v1274, %v1272
        %v1303 = vpack.c.bf16 %v1277, %v1275
        %v1304 = vpack.c.bf16 %v1278, %v1276
        %v1305 = vpack.c.bf16 %v1281, %v1279
        %v1306 = vpack.c.bf16 %v1282, %v1280
        %v1307 = vpack.c.bf16 %v1285, %v1283
        %v1308 = vpack.c.bf16 %v1286, %v1284
        %v1309 = vpack.c.bf16 %v1289, %v1287
        %v1310 = vpack.c.bf16 %v1290, %v1288
        %v1311 = vpack.c.bf16 %v1293, %v1291
        %v1312 = vpack.c.bf16 %v1294, %v1292
        %v1313 = vpack.c.bf16 %v1297, %v1295
        %v1314 = vpack.c.bf16 %v1298, %v1296
        %v1315 = vld [vmem:[#allocation8 + $0x8] sm:$0xf]
        %v1316 = vld [vmem:[#allocation8 + $0x14] sm:$0x7]
        %v1319 = vunpack.c.l.b16 %v1315
        %v1320 = vunpack.c.l.b16 %v1316
        %v1321 = vpack.c.b16 %v1320, %v1319
        %1323 = vmatprep.subr.bf16.mxu0 %v1300
        %1324 = vmatpush1.bf16.msra.mxu0 %v1299
        %1325 = vmatprep.subr.bf16.mxu0 %v1302
        %1326 = vmatpush1.bf16.msra.mxu0 %v1301
        %1327 = vmatprep.subr.bf16.mxu0 %v1304
        %1328 = vmatpush1.bf16.msra.mxu0 %v1303
        %1329 = vmatprep.subr.bf16.mxu0 %v1306
        %1330 = vmatpush1.bf16.msra.mxu0 %v1305
        %1331 = vmatprep.subr.bf16.mxu0 %v1308
        %1332 = vmatpush1.bf16.msra.mxu0 %v1307
        %1333 = vmatprep.subr.bf16.mxu0 %v1310
        %1334 = vmatpush1.bf16.msra.mxu0 %v1309
        %1335 = vmatprep.subr.bf16.mxu0 %v1312
        %1336 = vmatpush1.bf16.msra.mxu0 %v1311
        %1337 = vmatprep.subr.bf16.mxu0 %v1314
        %1338 = vmatpush1.bf16.msra.mxu0 %v1313
        %1339 = vmatprep.subr.bf16.mxu0 0
        %1340 = vmatpush1.bf16.msra.mxu0 0
        %1341 = vmatprep.subr.bf16.mxu0 0
        %1342 = vmatpush1.bf16.msra.mxu0 0
        %1343 = vmatprep.subr.bf16.mxu0 0
        %1344 = vmatpush1.bf16.msra.mxu0 0
        %1345 = vmatprep.subr.bf16.mxu0 0
        %1346 = vmatpush1.bf16.msra.mxu0 0
        %1347 = vmatprep.subr.bf16.mxu0 0
        %1348 = vmatpush1.bf16.msra.mxu0 0
        %1349 = vmatprep.subr.bf16.mxu0 0
        %1350 = vmatpush1.bf16.msra.mxu0 0
        %1351 = vmatprep.subr.bf16.mxu0 0
        %1352 = vmatpush1.bf16.msra.mxu0 0
        %1353 = vmatprep.subr.bf16.mxu0 0
        %1354 = vmatpush1.bf16.msra.mxu0 0
        %1355 = vmatprep.mubr.bf16.mxu0 0
        %1356 = vmatmul.mubr.bf16.gmra.mrb[0].mxu0 %v1321
        %v1357 = vpop.f32.mrb[0].mxu0
        %v1358 = vadd.f32 0.0, %v1357
        %v1359 = vpop.f32.mrb[0].mxu0
        %v1360 = vadd.f32 0.0, %v1359
        %v1361 = vpop.f32.mrb[0].mxu0
        %v1362 = vadd.f32 0.0, %v1361
        %v1363 = vpop.f32.mrb[0].mxu0
        %v1364 = vadd.f32 0.0, %v1363
        %1365 = vdwg.mxu0
        %v1368 = vunpack.c.l.b16 %v976
        %v1369 = vunpack.c.h.b16 %v976
        %v1370 = vunpack.c.l.b16 %v977
        %v1371 = vunpack.c.h.b16 %v977
        %v1372 = vpack.c.b16 %v1370, %v1368
        %v1373 = vpack.c.b16 %v1371, %v1369
        %1376 = vmatprep.subr.bf16.mxu0 %v945
        %1377 = vmatpush1.bf16.msra.mxu0 %v944
        %1378 = vmatprep.subr.bf16.mxu0 %v947
        %1379 = vmatpush1.bf16.msra.mxu0 %v946
        %1380 = vmatprep.subr.bf16.mxu0 %v949
        %1381 = vmatpush1.bf16.msra.mxu0 %v948
        %1382 = vmatprep.subr.bf16.mxu0 %v951
        %1383 = vmatpush1.bf16.msra.mxu0 %v950
        %1384 = vmatprep.subr.bf16.mxu0 %v953
        %1385 = vmatpush1.bf16.msra.mxu0 %v952
        %1386 = vmatprep.subr.bf16.mxu0 %v955
        %1387 = vmatpush1.bf16.msra.mxu0 %v954
        %1388 = vmatprep.subr.bf16.mxu0 %v957
        %1389 = vmatpush1.bf16.msra.mxu0 %v956
        %1390 = vmatprep.subr.bf16.mxu0 %v959
        %1391 = vmatpush1.bf16.msra.mxu0 %v958
        %1392 = vmatprep.subr.bf16.mxu0 %v961
        %1393 = vmatpush1.bf16.msra.mxu0 %v960
        %1394 = vmatprep.subr.bf16.mxu0 %v963
        %1395 = vmatpush1.bf16.msra.mxu0 %v962
        %1396 = vmatprep.subr.bf16.mxu0 %v965
        %1397 = vmatpush1.bf16.msra.mxu0 %v964
        %1398 = vmatprep.subr.bf16.mxu0 %v967
        %1399 = vmatpush1.bf16.msra.mxu0 %v966
        %1400 = vmatprep.subr.bf16.mxu0 %v969
        %1401 = vmatpush1.bf16.msra.mxu0 %v968
        %1402 = vmatprep.subr.bf16.mxu0 %v971
        %1403 = vmatpush1.bf16.msra.mxu0 %v970
        %1404 = vmatprep.subr.bf16.mxu0 %v973
        %1405 = vmatpush1.bf16.msra.mxu0 %v972
        %1406 = vmatprep.subr.bf16.mxu0 %v975
        %1407 = vmatpush1.bf16.msra.mxu0 %v974
        %1408 = vmatprep.mubr.bf16.mxu0 %v1373
        %1409 = vmatmul.mubr.bf16.gmra.mrb[0].mxu0 %v1372
        %v1410 = vpop.f32.mrb[0].mxu0
        %v1411 = vadd.f32 %v1358, %v1410
        %v1412 = vpop.f32.mrb[0].mxu0
        %v1413 = vadd.f32 %v1360, %v1412
        %v1414 = vpop.f32.mrb[0].mxu0
        %v1415 = vadd.f32 %v1362, %v1414
        %v1416 = vpop.f32.mrb[0].mxu0
        %v1417 = vadd.f32 %v1364, %v1416
        %1418 = vdwg.mxu0
        %v1419 = vld [vmem:[#allocation10] sm:$0xff]
        %v1420 = vld [vmem:[#allocation10 + $0x8] sm:$0x1f]
        %1422 = vset.pattern.permute.xlu0 0
        %1423 = vperm.xlu0 %1422, %v1419
        %v1424 = vpop.permute.xlu0 %1423
        %1427 = vset.pattern.permute.xlu0 0
        %1428 = vperm.xlu0 %1427, %v1420
        %v1429 = vpop.permute.xlu0 %1428
        %v1431 = vadd.f32 %v1411, %v1424
        %v1432 = vadd.f32 %v1413, %v1424
        %v1433 = vadd.f32 %v1415, %v1429
        %v1434 = vadd.f32 %v1417, %v1429
        %1435 = vst [vmem:[%s318] sm:$0xff] %v1431
        %1436 = vst [vmem:[%s318 + $0x8] sm:$0xff] %v1432
        %1437 = vst [vmem:[%s318 + $0x10] sm:$0x1f] %v1433
        %1438 = vst [vmem:[%s318 + $0x18] sm:$0x1f] %v1434
        %s1439 = sand.u32 %s158, 1
        %s1440 = scalar_lea.sflag [#allocation4], %s1439
        %s1441 = sand.u32 %s158, 1
        %s1442 = smul.addr %s1441, 32
        %s1443 = scalar_lea.vmem [#allocation11], %s1442
        // Predicated region
        $region61: #{sep_head_forward.1} parent=39 // pred_check
          %p1444 = pneg %p168
        $region62: #{sep_head_forward.1} parent=39 // pred_check_branch
          %1446 = sbr.rel (%p1444) target = $region64
        $region63: #{sep_head_forward.1} parent=39 // pred_region
          %s1447 = smul.u32 2, %s29
          %s1449 = ssub.s32 512, 512
          %1450 = vsyncadd %s1440, %s1449
          %s1451 = smul.addr %s28, 4
          %s1452 = sadd.s32 %s1447, %s1451
          %s1453 = smul.addr %s1452, 128
          %s1454 = scalar_lea.hbm %s5, %s1453
          %s1455 = sshll.u32 %s1443, 4
          %s1456 = int_to_ptr.vmem [resolvable:$true] %s1455
          %1461 = dma.vmem_to_hbm [thread:$0]  %s1456, 512, %s1454, %s1440, 256, 256, 16
        $region64: #{sep_head_forward.1} parent=39 // pred_fallthru
          _
      $region40: #{sep_head_forward.1} parent=5 // pred_fallthru
        _
      %p1462 = scmp.le.s32.totalorder 2, %s19
      // Predicated region
      $region65: #{sep_head_forward.1} parent=5 // pred_check
        %p1463 = pneg %p1462
      $region66: #{sep_head_forward.1} parent=5 // pred_check_branch
        %1465 = sbr.rel (%p1463) target = $region68
      $region67: #{sep_head_forward.1} parent=5 // pred_region
        %s1466 = ssub.s32 %s19, 2
        // Predicated region
        $region69: #{sep_head_forward.1} parent=67 // pred_check
          %p1467 = pneg %p174
        $region70: #{sep_head_forward.1} parent=67 // pred_check_branch
          %1469 = sbr.rel (%p1467) target = $region72
        $region71: #{sep_head_forward.1} parent=67 // pred_region
          %s1470 = sand.u32 %s159, 1
          %s1471 = scalar_lea.sflag [#allocation4], %s1470
          %s1472 = sand.u32 %s159, 1
          %s1473 = smul.addr %s1472, 32
          %s1474 = scalar_lea.vmem [#allocation11], %s1473
          %1475 = dma.done %s1471, 512
        $region72: #{sep_head_forward.1} parent=67 // pred_fallthru
          _
      $region68: #{sep_head_forward.1} parent=5 // pred_fallthru
        _
    $region6: #{sep_head_forward.1} parent=1 // loop_footer
      %s23 = sadd.s32 1, %s19
    $region7: #{sep_head_forward.1} parent=1 // loop_footer_branch
      %18 = sbr.rel target = $region3
    $region8: #{sep_head_forward.1} parent=1 // loop_exit
      _
    %1476 = vsyncpa [#allocation3], 1
    %s1477 = scalar_lea.sflag [#allocation3], 1
    %1478 = vsyncpa %s1477, 1
    %1479 = vsyncpa [#allocation6], 1
    %1480 = vsyncpa [#allocation9], 1
    %1481 = vsyncpa [#allocation4], 1
    %s1482 = scalar_lea.sflag [#allocation4], 1
    %1483 = vsyncpa %s1482, 1

</llo_original>
